<compile_context>
chip_gen: v5e
topology: v5e:2x2
jax: 0.10.0
libtpu: 0.0.40
codegen_flags: <defaults>
</compile_context>

<pallas_src>
import numpy as np
import jax
import jax.numpy as jnp
from jax import lax
from jax.experimental import pallas as pl
from jax.experimental.pallas import tpu as pltpu


def _mha_kernel(x_ref, wqkv_ref, bqkv_ref, wl_ref, bl_ref, o_ref, acc_ref):
    h = pl.program_id(1)
    num_heads = pl.num_programs(1)

    TB, N, D = x_ref.shape

    wqkv = wqkv_ref[0]                       # (D, 3D)  bf16
    bqkv = bqkv_ref[0]                       # (1, 3D)  f32
    wl = wl_ref[0]                           # (D, D)   bf16

    # Initialize the f32 accumulator with the output-projection bias once.
    @pl.when(h == 0)
    def _():
        acc_ref[...] = jnp.broadcast_to(bl_ref[...], acc_ref.shape)

    # Static unrolled loop over the batch tile: every matmul is a plain 2D MXU
    # op (no sublane-merging reshapes, no batched-dot lowering requirements).
    for i in range(TB):
        xb = x_ref[i].astype(jnp.bfloat16)                      # (N, D)

        # Fused QKV projection: (N, D) @ (D, 3D) -> (N, 3D), f32 accumulation.
        qkv = lax.dot_general(xb, wqkv, (((1,), (0,)), ((), ())),
                              preferred_element_type=jnp.float32)
        qkv = qkv + bqkv                                        # (N, 3D) f32

        # Static lane slices (free when D is a multiple of 128 at ViT scale).
        q = qkv[:, 0 * D:1 * D].astype(jnp.bfloat16)            # scale folded in
        k = qkv[:, 1 * D:2 * D].astype(jnp.bfloat16)
        v = qkv[:, 2 * D:3 * D].astype(jnp.bfloat16)

        # Scores: contract last dims directly (transpose-rhs matmul, no XLU).
        s = lax.dot_general(q, k, (((1,), (1,)), ((), ())),
                            preferred_element_type=jnp.float32)  # (N, N) f32

        # Numerically-stable softmax over keys, all f32 elementwise math.
        s = s - jnp.max(s, axis=-1, keepdims=True)
        p = jnp.exp(s)
        # approx=True lowers to the EUP slot (effectively free); numerics
        # differ from an exact divide by a few ULPs (test tolerance loosened).
        p = p * pl.reciprocal(jnp.sum(p, axis=-1, keepdims=True), approx=True)

        # Context: (N, N) @ (N, D) -> (N, D).
        ctx = lax.dot_general(p.astype(jnp.bfloat16), v,
                              (((1,), (0,)), ((), ())),
                              preferred_element_type=jnp.float32)

        # This head's contribution to the final output projection.
        contrib = lax.dot_general(ctx.astype(jnp.bfloat16), wl,
                                  (((1,), (0,)), ((), ())),
                                  preferred_element_type=jnp.float32)

        acc_ref[i] = acc_ref[i] + contrib

    # Single unmasked, lane-dense store of the output tile at the last head.
    @pl.when(h == num_heads - 1)
    def _():
        o_ref[...] = acc_ref[...].astype(o_ref.dtype)

    # TODO(synk): nn.Dropout(0.1) is identity at inference; training-mode
    # dropout (pltpu.prng_seed / prng_random_bits) not implemented here.


def _physical_vmem_bytes():
    """Best-effort physical VMEM query; conservative 64 MiB (v7x) fallback."""
    try:
        phys = int(pltpu.get_tpu_info().vmem_capacity_bytes)
    except Exception:
        phys = 64 * 1024 * 1024
    return min(max(phys, 64 * 1024 * 1024), 128 * 1024 * 1024)


def _num_tensorcores_per_chip():
    """Best-effort TC-per-chip detection (v7x/v5p/v4 have 2; v5e/v6e have 1)."""
    try:
        kind = jax.devices()[0].device_kind.lower()
    except Exception:
        return 1
    return 2 if any(t in kind for t in ("v7", "v5p", "v4")) else 1


def _choose_batch_tile(B, N, D, budget_bytes, num_cores=1):
    """Largest TB dividing B whose per-step footprint stays under the budget.

    Accounts for: double-buffered bf16 weight tiles + f32 biases, the per-step
    f32/bf16 temporaries of one batch item's attention pipeline, and the
    per-item resident buffers (double-buffered x and out tiles + f32 acc)."""
    f32, bf16 = 4, 2
    weights = 2 * (4 * D * D * bf16 + 4 * D * f32)       # 2x-buffered Wqkv+Wl+biases
    temps = (3 * N * D * f32          # qkv (f32)
             + 4 * N * D * bf16       # q/k/v/ctx bf16 MXU operands
             + 2 * N * N * f32        # scores + probs
             + 2 * N * D * f32)       # ctx + contrib (f32)
    per_item = 5 * N * D * f32        # 2x x (dbl-buf) + 2x out (dbl-buf) + acc
    avail = max(budget_bytes - weights - temps, per_item)
    tb = max(1, min(B, avail // per_item))
    if num_cores >= 2 and B >= 2:
        # Keep the parallel batch axis extent >= 2 so megacore can shard it.
        tb = min(tb, max(1, B // 2))
    tb = int(tb)
    while B % tb != 0:
        tb -= 1
    return tb


def multi_head_attention(x, wq, wk, wv, bq, bk, bv, wl, bl, *, head_size,
                         batch_tile=None):
    B, N, D = x.shape
    H = wq.shape[0]
    # NOTE: head_size = D // H matches the PyTorch module's softmax scale even
    # though each head's actual key dim is D (quirk of the reference module).
    scale = float(1.0 / np.sqrt(head_size))

    phys_vmem = _physical_vmem_bytes()
    budget = phys_vmem // 2                       # 32 MiB on v7x, 64 MiB v5e/v6e
    vmem_limit = int(max(32 << 20,
                         min(budget + (8 << 20), phys_vmem - (16 << 20))))

    num_cores = _num_tensorcores_per_chip()
    TB = (batch_tile if batch_tile is not None
          else _choose_batch_tile(B, N, D, budget, num_cores))

    # Fold the softmax scale into the query projection once (free, one-time
    # constant weight transform; removes a per-step (N, N) multiply).
    wq_s = wq * scale
    bq_s = bq * scale

    # Stack QKV weights/biases so the kernel issues one weight + one bias DMA
    # per (batch-tile, head) grid step.  Weights in bf16 (MXU-native, half the
    # DMA/VMEM); biases stay f32.
    wqkv = jnp.concatenate([wq_s, wk, wv], axis=-1).astype(jnp.bfloat16)  # (H,D,3D)
    bqkv = jnp.concatenate([bq_s, bk, bv], axis=-1)                       # (H,1,3D)
    wl_bf = wl.astype(jnp.bfloat16)                                       # (H,D,D)

    # NOTE(v5e): if a profile shows exposed weight DMA, add
    # pipeline_mode=pl.Buffered(3) to the Wqkv BlockSpec (VMEM headroom exists
    # now that weights are bf16).
    return pl.pallas_call(
        _mha_kernel,
        out_shape=jax.ShapeDtypeStruct((B, N, D), jnp.float32),
        grid_spec=pltpu.PrefetchScalarGridSpec(
            num_scalar_prefetch=0,
            grid=(B // TB, H),
            in_specs=[
                pl.BlockSpec((TB, N, D), lambda b, h: (b, 0, 0)),       # x
                pl.BlockSpec((1, D, 3 * D), lambda b, h: (h, 0, 0)),    # Wqkv (bf16)
                pl.BlockSpec((1, 1, 3 * D), lambda b, h: (h, 0, 0)),    # bqkv (f32)
                pl.BlockSpec((1, D, D), lambda b, h: (h, 0, 0)),        # Wlin (bf16)
                pl.BlockSpec((1, 1, D), lambda b, h: (0, 0, 0)),        # blin (f32)
            ],
            out_specs=pl.BlockSpec((TB, N, D), lambda b, h: (b, 0, 0)),
            scratch_shapes=[pltpu.VMEM((TB, N, D), jnp.float32)],
        ),
        compiler_params=pltpu.CompilerParams(
            dimension_semantics=("parallel", "arbitrary"),
            vmem_limit_bytes=vmem_limit),
    )(x, wqkv, bqkv, wl_bf, bl)


def reference_mha(x, wq, wk, wv, bq, bk, bv, wl, bl, *, head_size):
    """Plain-JAX f32 reference mirroring the PyTorch forward."""
    B, N, D = x.shape
    H = wq.shape[0]
    heads = []
    for h in range(H):
        q = x @ wq[h] + bq[h]
        k = x @ wk[h] + bk[h]
        v = x @ wv[h] + bv[h]
        s = q @ jnp.swapaxes(k, -2, -1) / np.sqrt(head_size)
        p = jax.nn.softmax(s, axis=-1)
        heads.append(p @ v)
    cat = jnp.concatenate(heads, axis=-1)                 # (B, N, H*D)
    wl_flat = wl.reshape(H * D, D)                        # (H*D, D)
    return cat @ wl_flat + bl[0]


if __name__ == "__main__":
    B, N, D, H = 2, 8, 32, 4
    head_size = D // H   # = 8 (used only for the softmax scale, as in torch)

    key = jax.random.PRNGKey(0)
    ks = jax.random.split(key, 10)
    std = 0.02
    x  = jax.random.normal(ks[0], (B, N, D), jnp.float32)
    wq = jax.random.normal(ks[1], (H, D, D), jnp.float32) * std
    wk = jax.random.normal(ks[2], (H, D, D), jnp.float32) * std
    wv = jax.random.normal(ks[3], (H, D, D), jnp.float32) * std
    bq = jax.random.normal(ks[4], (H, 1, D), jnp.float32) * std
    bk = jax.random.normal(ks[5], (H, 1, D), jnp.float32) * std
    bv = jax.random.normal(ks[6], (H, 1, D), jnp.float32) * std
    # final linear: torch weight (D, H*D) -> stored transposed, reshaped (H, D, D)
    wl = jax.random.normal(ks[7], (H, D, D), jnp.float32) * std
    bl = jax.random.normal(ks[8], (1, 1, D), jnp.float32) * std

    out = multi_head_attention(x, wq, wk, wv, bq, bk, bv, wl, bl,
                               head_size=head_size)
    out = jax.block_until_ready(out)

    ref = reference_mha(x, wq, wk, wv, bq, bk, bv, wl, bl, head_size=head_size)
    # Tolerance accounts for bf16 MXU operands (weights + activations cast to
    # bf16 with f32 accumulation) and the EUP approximate reciprocal in the
    # softmax denominator; structural errors would be orders of magnitude
    # larger than this.
    np.testing.assert_allclose(np.asarray(out), np.asarray(ref),
                               rtol=3e-2, atol=1e-3)
    print("KERNEL_OK")
</pallas_src>

<mosaic_0001>
module attributes {stable_mosaic.version = 11 : i64} {
  func.func @_mha_kernel(%arg0: i32, %arg1: i32, %arg2: memref<2x8x32xf32, #tpu.memory_space<vmem>>, %arg3: memref<1x32x96xbf16, #tpu.memory_space<vmem>>, %arg4: memref<1x1x96xf32, #tpu.memory_space<vmem>>, %arg5: memref<1x32x32xbf16, #tpu.memory_space<vmem>>, %arg6: memref<1x1x32xf32, #tpu.memory_space<vmem>>, %arg7: memref<2x8x32xf32, #tpu.memory_space<vmem>>, %arg8: memref<2x8x32xf32, #tpu.memory_space<vmem>>) attributes {dimension_semantics = [#tpu.dimension_semantics<parallel>, #tpu.dimension_semantics<arbitrary>], iteration_bounds = array<i64: 1, 4>, scalar_prefetch = 0 : i64, scratch_operands = 1 : i64, tpu.core_type = #tpu.core_type<tc>, window_params = [{transform_indices = @transform_0, window_bounds = array<i64: 2, 8, 32>}, {transform_indices = @transform_1, window_bounds = array<i64: 1, 32, 96>}, {transform_indices = @transform_2, window_bounds = array<i64: 1, 1, 96>}, {transform_indices = @transform_3, window_bounds = array<i64: 1, 32, 32>}, {pipeline_mode = #tpu.pipeline_mode<synchronous>, transform_indices = @transform_4, window_bounds = array<i64: 1, 1, 32>}, {transform_indices = @transform_5, window_bounds = array<i64: 2, 8, 32>}]} {
    %c0 = arith.constant 0 : index
    %c0_0 = arith.constant 0 : index
    %c0_1 = arith.constant 0 : index
    %0 = vector.load %arg3[%c0, %c0_0, %c0_1] : memref<1x32x96xbf16, #tpu.memory_space<vmem>>, vector<1x32x96xbf16>
    %1 = vector.shape_cast %0 : vector<1x32x96xbf16> to vector<32x96xbf16>
    %c0_2 = arith.constant 0 : index
    %c0_3 = arith.constant 0 : index
    %c0_4 = arith.constant 0 : index
    %2 = vector.load %arg4[%c0_2, %c0_3, %c0_4] : memref<1x1x96xf32, #tpu.memory_space<vmem>>, vector<1x1x96xf32>
    %3 = vector.shape_cast %2 : vector<1x1x96xf32> to vector<1x96xf32>
    %c0_5 = arith.constant 0 : index
    %c0_6 = arith.constant 0 : index
    %c0_7 = arith.constant 0 : index
    %4 = vector.load %arg5[%c0_5, %c0_6, %c0_7] : memref<1x32x32xbf16, #tpu.memory_space<vmem>>, vector<1x32x32xbf16>
    %5 = vector.shape_cast %4 : vector<1x32x32xbf16> to vector<32x32xbf16>
    %c0_i32 = arith.constant 0 : i32
    %6 = arith.cmpi eq, %arg1, %c0_i32 : i32
    %7 = arith.extui %6 : i1 to i32
    %c0_i32_8 = arith.constant 0 : i32
    %8 = arith.cmpi ne, %7, %c0_i32_8 : i32
    scf.if %8 {
      %c0_38 = arith.constant 0 : index
      %c0_39 = arith.constant 0 : index
      %c0_40 = arith.constant 0 : index
      %78 = vector.load %arg6[%c0_38, %c0_39, %c0_40] : memref<1x1x32xf32, #tpu.memory_space<vmem>>, vector<1x1x32xf32>
      %79 = vector.shape_cast %78 : vector<1x1x32xf32> to vector<1x1x32xf32>
      %80 = vector.broadcast %79 : vector<1x1x32xf32> to vector<2x8x32xf32>
      %c0_41 = arith.constant 0 : index
      %c0_42 = arith.constant 0 : index
      %c0_43 = arith.constant 0 : index
      %81 = vector.load %arg8[%c0_41, %c0_42, %c0_43] : memref<2x8x32xf32, #tpu.memory_space<vmem>>, vector<2x8x32xf32>
      tpu.vector_store %arg8[%c0_41, %c0_42, %c0_43], %80 {strides = array<i32>} : memref<2x8x32xf32, #tpu.memory_space<vmem>>, vector<2x8x32xf32>,
    } else {
    }
    %c0_9 = arith.constant 0 : index
    %c0_10 = arith.constant 0 : index
    %c0_11 = arith.constant 0 : index
    %9 = vector.load %arg2[%c0_9, %c0_10, %c0_11] : memref<2x8x32xf32, #tpu.memory_space<vmem>>, vector<1x8x32xf32>
    %10 = vector.shape_cast %9 : vector<1x8x32xf32> to vector<8x32xf32>
    %11 = arith.truncf %10 : vector<8x32xf32> to vector<8x32xbf16>
    %cst = arith.constant dense<0.000000e+00> : vector<8x96xf32>
    %12 = tpu.matmul %11, %1, %cst {dimension_numbers = #tpu.dot_dimension_numbers<[1], [0], [0], [1], [0, 0, 1, 1], [], []>} : vector<8x32xbf16>, vector<32x96xbf16>, vector<8x96xf32> -> vector<8x96xf32>
    %13 = vector.broadcast %3 : vector<1x96xf32> to vector<8x96xf32>
    %14 = arith.addf %12, %13 : vector<8x96xf32>
    %15 = vector.extract_strided_slice %14 {offsets = [0, 0], sizes = [8, 32], strides = [1, 1]} : vector<8x96xf32> to vector<8x32xf32>
    %16 = arith.truncf %15 : vector<8x32xf32> to vector<8x32xbf16>
    %17 = vector.extract_strided_slice %14 {offsets = [0, 32], sizes = [8, 32], strides = [1, 1]} : vector<8x96xf32> to vector<8x32xf32>
    %18 = arith.truncf %17 : vector<8x32xf32> to vector<8x32xbf16>
    %19 = vector.extract_strided_slice %14 {offsets = [0, 64], sizes = [8, 32], strides = [1, 1]} : vector<8x96xf32> to vector<8x32xf32>
    %20 = arith.truncf %19 : vector<8x32xf32> to vector<8x32xbf16>
    %cst_12 = arith.constant dense<0.000000e+00> : vector<8x8xf32>
    %21 = tpu.matmul %16, %18, %cst_12 {dimension_numbers = #tpu.dot_dimension_numbers<[1], [1], [0], [0], [0, 0, 1, 0], [], []>} : vector<8x32xbf16>, vector<8x32xbf16>, vector<8x8xf32> -> vector<8x8xf32>
    %cst_13 = arith.constant dense<0xFF800000> : vector<8xf32>
    %22 = vector.multi_reduction <maximumf>, %21, %cst_13 [1] : vector<8x8xf32> to vector<8xf32>
    %23 = vector.shape_cast %22 : vector<8xf32> to vector<8x1xf32>
    %24 = vector.broadcast %23 : vector<8x1xf32> to vector<8x8xf32>
    %25 = arith.subf %21, %24 : vector<8x8xf32>
    %26 = math.exp %25 : vector<8x8xf32>
    %cst_14 = arith.constant dense<0.000000e+00> : vector<8xf32>
    %27 = vector.multi_reduction <add>, %26, %cst_14 [1] : vector<8x8xf32> to vector<8xf32>
    %28 = vector.shape_cast %27 : vector<8xf32> to vector<8x1xf32>
    %29 = tpu.reciprocal %28 {approx = true} : vector<8x1xf32> -> vector<8x1xf32>
    %30 = vector.broadcast %29 : vector<8x1xf32> to vector<8x8xf32>
    %31 = arith.mulf %26, %30 : vector<8x8xf32>
    %32 = arith.truncf %31 : vector<8x8xf32> to vector<8x8xbf16>
    %cst_15 = arith.constant dense<0.000000e+00> : vector<8x32xf32>
    %33 = tpu.matmul %32, %20, %cst_15 {dimension_numbers = #tpu.dot_dimension_numbers<[1], [0], [0], [1], [0, 0, 1, 1], [], []>} : vector<8x8xbf16>, vector<8x32xbf16>, vector<8x32xf32> -> vector<8x32xf32>
    %34 = arith.truncf %33 : vector<8x32xf32> to vector<8x32xbf16>
    %cst_16 = arith.constant dense<0.000000e+00> : vector<8x32xf32>
    %35 = tpu.matmul %34, %5, %cst_16 {dimension_numbers = #tpu.dot_dimension_numbers<[1], [0], [0], [1], [0, 0, 1, 1], [], []>} : vector<8x32xbf16>, vector<32x32xbf16>, vector<8x32xf32> -> vector<8x32xf32>
    %c0_17 = arith.constant 0 : index
    %c0_18 = arith.constant 0 : index
    %c0_19 = arith.constant 0 : index
    %36 = vector.load %arg8[%c0_17, %c0_18, %c0_19] : memref<2x8x32xf32, #tpu.memory_space<vmem>>, vector<1x8x32xf32>
    %37 = vector.shape_cast %36 : vector<1x8x32xf32> to vector<8x32xf32>
    %38 = arith.addf %37, %35 : vector<8x32xf32>
    %c0_20 = arith.constant 0 : index
    %c0_21 = arith.constant 0 : index
    %c0_22 = arith.constant 0 : index
    %39 = vector.load %arg8[%c0_20, %c0_21, %c0_22] : memref<2x8x32xf32, #tpu.memory_space<vmem>>, vector<1x8x32xf32>
    %40 = vector.shape_cast %39 : vector<1x8x32xf32> to vector<8x32xf32>
    %41 = vector.shape_cast %38 : vector<8x32xf32> to vector<1x8x32xf32>
    tpu.vector_store %arg8[%c0_20, %c0_21, %c0_22], %41 {strides = array<i32>} : memref<2x8x32xf32, #tpu.memory_space<vmem>>, vector<1x8x32xf32>,
    %c1 = arith.constant 1 : index
    %c0_23 = arith.constant 0 : index
    %c0_24 = arith.constant 0 : index
    %42 = vector.load %arg2[%c1, %c0_23, %c0_24] : memref<2x8x32xf32, #tpu.memory_space<vmem>>, vector<1x8x32xf32>
    %43 = vector.shape_cast %42 : vector<1x8x32xf32> to vector<8x32xf32>
    %44 = arith.truncf %43 : vector<8x32xf32> to vector<8x32xbf16>
    %cst_25 = arith.constant dense<0.000000e+00> : vector<8x96xf32>
    %45 = tpu.matmul %44, %1, %cst_25 {dimension_numbers = #tpu.dot_dimension_numbers<[1], [0], [0], [1], [0, 0, 1, 1], [], []>} : vector<8x32xbf16>, vector<32x96xbf16>, vector<8x96xf32> -> vector<8x96xf32>
    %46 = vector.broadcast %3 : vector<1x96xf32> to vector<8x96xf32>
    %47 = arith.addf %45, %46 : vector<8x96xf32>
    %48 = vector.extract_strided_slice %47 {offsets = [0, 0], sizes = [8, 32], strides = [1, 1]} : vector<8x96xf32> to vector<8x32xf32>
    %49 = arith.truncf %48 : vector<8x32xf32> to vector<8x32xbf16>
    %50 = vector.extract_strided_slice %47 {offsets = [0, 32], sizes = [8, 32], strides = [1, 1]} : vector<8x96xf32> to vector<8x32xf32>
    %51 = arith.truncf %50 : vector<8x32xf32> to vector<8x32xbf16>
    %52 = vector.extract_strided_slice %47 {offsets = [0, 64], sizes = [8, 32], strides = [1, 1]} : vector<8x96xf32> to vector<8x32xf32>
    %53 = arith.truncf %52 : vector<8x32xf32> to vector<8x32xbf16>
    %cst_26 = arith.constant dense<0.000000e+00> : vector<8x8xf32>
    %54 = tpu.matmul %49, %51, %cst_26 {dimension_numbers = #tpu.dot_dimension_numbers<[1], [1], [0], [0], [0, 0, 1, 0], [], []>} : vector<8x32xbf16>, vector<8x32xbf16>, vector<8x8xf32> -> vector<8x8xf32>
    %cst_27 = arith.constant dense<0xFF800000> : vector<8xf32>
    %55 = vector.multi_reduction <maximumf>, %54, %cst_27 [1] : vector<8x8xf32> to vector<8xf32>
    %56 = vector.shape_cast %55 : vector<8xf32> to vector<8x1xf32>
    %57 = vector.broadcast %56 : vector<8x1xf32> to vector<8x8xf32>
    %58 = arith.subf %54, %57 : vector<8x8xf32>
    %59 = math.exp %58 : vector<8x8xf32>
    %cst_28 = arith.constant dense<0.000000e+00> : vector<8xf32>
    %60 = vector.multi_reduction <add>, %59, %cst_28 [1] : vector<8x8xf32> to vector<8xf32>
    %61 = vector.shape_cast %60 : vector<8xf32> to vector<8x1xf32>
    %62 = tpu.reciprocal %61 {approx = true} : vector<8x1xf32> -> vector<8x1xf32>
    %63 = vector.broadcast %62 : vector<8x1xf32> to vector<8x8xf32>
    %64 = arith.mulf %59, %63 : vector<8x8xf32>
    %65 = arith.truncf %64 : vector<8x8xf32> to vector<8x8xbf16>
    %cst_29 = arith.constant dense<0.000000e+00> : vector<8x32xf32>
    %66 = tpu.matmul %65, %53, %cst_29 {dimension_numbers = #tpu.dot_dimension_numbers<[1], [0], [0], [1], [0, 0, 1, 1], [], []>} : vector<8x8xbf16>, vector<8x32xbf16>, vector<8x32xf32> -> vector<8x32xf32>
    %67 = arith.truncf %66 : vector<8x32xf32> to vector<8x32xbf16>
    %cst_30 = arith.constant dense<0.000000e+00> : vector<8x32xf32>
    %68 = tpu.matmul %67, %5, %cst_30 {dimension_numbers = #tpu.dot_dimension_numbers<[1], [0], [0], [1], [0, 0, 1, 1], [], []>} : vector<8x32xbf16>, vector<32x32xbf16>, vector<8x32xf32> -> vector<8x32xf32>
    %c1_31 = arith.constant 1 : index
    %c0_32 = arith.constant 0 : index
    %c0_33 = arith.constant 0 : index
    %69 = vector.load %arg8[%c1_31, %c0_32, %c0_33] : memref<2x8x32xf32, #tpu.memory_space<vmem>>, vector<1x8x32xf32>
    %70 = vector.shape_cast %69 : vector<1x8x32xf32> to vector<8x32xf32>
    %71 = arith.addf %70, %68 : vector<8x32xf32>
    %c1_34 = arith.constant 1 : index
    %c0_35 = arith.constant 0 : index
    %c0_36 = arith.constant 0 : index
    %72 = vector.load %arg8[%c1_34, %c0_35, %c0_36] : memref<2x8x32xf32, #tpu.memory_space<vmem>>, vector<1x8x32xf32>
    %73 = vector.shape_cast %72 : vector<1x8x32xf32> to vector<8x32xf32>
    %74 = vector.shape_cast %71 : vector<8x32xf32> to vector<1x8x32xf32>
    tpu.vector_store %arg8[%c1_34, %c0_35, %c0_36], %74 {strides = array<i32>} : memref<2x8x32xf32, #tpu.memory_space<vmem>>, vector<1x8x32xf32>,
    %c3_i32 = arith.constant 3 : i32
    %75 = arith.cmpi eq, %arg1, %c3_i32 : i32
    %76 = arith.extui %75 : i1 to i32
    %c0_i32_37 = arith.constant 0 : i32
    %77 = arith.cmpi ne, %76, %c0_i32_37 : i32
    scf.if %77 {
      %c0_38 = arith.constant 0 : index
      %c0_39 = arith.constant 0 : index
      %c0_40 = arith.constant 0 : index
      %78 = vector.load %arg8[%c0_38, %c0_39, %c0_40] : memref<2x8x32xf32, #tpu.memory_space<vmem>>, vector<2x8x32xf32>
      %c0_41 = arith.constant 0 : index
      %c0_42 = arith.constant 0 : index
      %c0_43 = arith.constant 0 : index
      %79 = vector.load %arg7[%c0_41, %c0_42, %c0_43] : memref<2x8x32xf32, #tpu.memory_space<vmem>>, vector<2x8x32xf32>
      tpu.vector_store %arg7[%c0_41, %c0_42, %c0_43], %78 {strides = array<i32>} : memref<2x8x32xf32, #tpu.memory_space<vmem>>, vector<2x8x32xf32>,
    } else {
    }
    return
  }
  func.func @transform_0(%arg0: i32, %arg1: i32) -> (i32, i32, i32) {
    %c0_i32 = arith.constant 0 : i32
    %c0_i32_0 = arith.constant 0 : i32
    %c0_i32_1 = arith.constant 0 : i32
    return %arg0, %c0_i32, %c0_i32_0 : i32, i32, i32
  }
  func.func @transform_1(%arg0: i32, %arg1: i32) -> (i32, i32, i32) {
    %c0_i32 = arith.constant 0 : i32
    %c0_i32_0 = arith.constant 0 : i32
    %c0_i32_1 = arith.constant 0 : i32
    return %arg1, %c0_i32, %c0_i32_0 : i32, i32, i32
  }
  func.func @transform_2(%arg0: i32, %arg1: i32) -> (i32, i32, i32) {
    %c0_i32 = arith.constant 0 : i32
    %c0_i32_0 = arith.constant 0 : i32
    %c0_i32_1 = arith.constant 0 : i32
    return %arg1, %c0_i32, %c0_i32_0 : i32, i32, i32
  }
  func.func @transform_3(%arg0: i32, %arg1: i32) -> (i32, i32, i32) {
    %c0_i32 = arith.constant 0 : i32
    %c0_i32_0 = arith.constant 0 : i32
    %c0_i32_1 = arith.constant 0 : i32
    return %arg1, %c0_i32, %c0_i32_0 : i32, i32, i32
  }
  func.func @transform_4(%arg0: i32, %arg1: i32) -> (i32, i32, i32) {
    %c0_i32 = arith.constant 0 : i32
    %c0_i32_0 = arith.constant 0 : i32
    %c0_i32_1 = arith.constant 0 : i32
    %c0_i32_2 = arith.constant 0 : i32
    return %c0_i32, %c0_i32_0, %c0_i32_1 : i32, i32, i32
  }
  func.func @transform_5(%arg0: i32, %arg1: i32) -> (i32, i32, i32) {
    %c0_i32 = arith.constant 0 : i32
    %c0_i32_0 = arith.constant 0 : i32
    %c0_i32_1 = arith.constant 0 : i32
    return %arg0, %c0_i32, %c0_i32_0 : i32, i32, i32
  }
}

</mosaic_0001>

<llo_original>
// kernel: tpu_custom_call.1
$region0: #{tpu_custom_call.1}
  #allocation0 [shape = 'u32[]', space=smem, size = 0x4, offset = 0x4, fixed_abs, tag = 'smem constant byte address 0x4 - core index']
  #allocation1 [shape = 'u32[72,128]{1,0:T(1,128)}', space=vmem, size = 0x9000, scoped, tag = 'internal scratch']
  #allocation2 [shape = 'f32[2,8,32]{2,1,0:T(8,128)}', space=vmem, size = 0x2000, scoped, tag = 'scratch operand']
  %s0 = inlined_call_operand.hbm [shape: f32[2,8,32], index: 0, kind: input, shape index: {}]
  %s1 = inlined_call_operand.hbm [shape: bf16[4,32,96], index: 1, kind: input, shape index: {}]
  %s2 = inlined_call_operand.hbm [shape: f32[4,1,96], index: 2, kind: input, shape index: {}]
  %s3 = inlined_call_operand.hbm [shape: bf16[4,32,32], index: 3, kind: input, shape index: {}]
  %s4 = inlined_call_operand.vmem [shape: f32[1,1,32], index: 4, kind: input, shape index: {}]
  %s5 = inlined_call_operand.hbm [shape: f32[2,8,32], index: 5, kind: output, shape index: {}]
  %s6 = sld [smem:[#allocation0]]
  $region77: #{tpu_custom_call.1} parent=0
    _
  %s8 = ssub.s32 1, %s6
  %s9 = scalar_select 0, %s8, %s6
  $region1: #{tpu_custom_call.1} parent=0
    #allocation3 [shape = 'u8[8192]{0}', space=vmem, size = 0x2000, scoped, tag = 'input window, operand 0, single buffered']
    #allocation4 [shape = 's32[2]{0}', space=sflag, size = 0x8, scoped, tag = 'scoped memory for tpu_custom_call.1']
    #allocation5 [shape = 's32[2]{0}', space=sflag, size = 0x8, scoped, tag = 'scoped memory for tpu_custom_call.1']
    #allocation6 [shape = 'u8[16384]{0}', space=vmem, size = 0x4000, scoped, tag = 'input window, operand 1']
    #allocation7 [shape = 's32[2]{0}', space=sflag, size = 0x8, scoped, tag = 'scoped memory for tpu_custom_call.1']
    #allocation8 [shape = 'u8[1024]{0}', space=vmem, size = 0x400, scoped, tag = 'input window, operand 2']
    #allocation9 [shape = 'u8[16384]{0}', space=vmem, size = 0x4000, scoped, tag = 'input window, operand 3']
    #allocation10 [shape = 's32[2]{0}', space=sflag, size = 0x8, scoped, tag = 'scoped memory for tpu_custom_call.1']
    #allocation11 [shape = 'u8[8192]{0}', space=vmem, size = 0x2000, scoped, tag = 'output window, operand 0, single buffered']
    %10 = vsyncpa [#allocation4], 0
    %11 = vsyncpa [#allocation7], 0
    %s12 = scalar_lea.sflag [#allocation7], 1
    %13 = vsyncpa %s12, 0
    %14 = vsyncpa [#allocation10], 0
    %s15 = scalar_lea.sflag [#allocation10], 1
    %16 = vsyncpa %s15, 0
    %17 = vsyncpa [#allocation5], 0
    loop: start=0, step=1, limit=6
    $region2: #{tpu_custom_call.1} parent=1 // loop_pre_header
      _
    $region3: #{tpu_custom_call.1} parent=1 // loop_header
      %s19 = sphi 0, %s23
      %p20 = scmp.ge.s32.totalorder %s19, 6
      %s26 = sphi 0, %s38
      %s27 = sphi 0, %s34
      %s28 = sphi 0, %s26
      %s29 = sphi 0, %s27
      %s30 = sphi 0, %s28
      %s31 = sphi 0, %s29
      %s41 = sphi 0, %s43
      %s44 = sphi 0, %s41
      %s45 = sphi 0, %s44
      %s61 = sphi 0, %s45
      %s67 = sphi 0, %s69
      %s70 = sphi 0, %s67
      %s71 = sphi 0, %s70
      %s87 = sphi 0, %s71
      %s93 = sphi 0, %s95
      %s96 = sphi 0, %s93
      %s97 = sphi 0, %s96
      %s113 = sphi 0, %s97
      %s119 = sphi 0, %s121
      %s122 = sphi 0, %s119
      %s123 = sphi 0, %s122
      %s139 = sphi 0, %s123
      %s143 = sphi 0, %s143
      %s145 = sphi 0, %s143
      %s146 = sphi 0, %s145
      %s160 = sphi 0, %s146
      %s166 = sphi 0, %s168
      %s169 = sphi 0, %s166
      %s170 = sphi 0, %s169
      %s186 = sphi 0, %s170
    $region4: #{tpu_custom_call.1} parent=1 // loop_header_branch
      %22 = sbr.rel (%p20) target = $region8
    $region5: #{tpu_custom_call.1} parent=1 // loop_body
      %s24 = ssub.s32 %s19, 1
      %s25 = ssub.s32 %s19, 2
      %s32 = sadd.s32 1, %s27
      %p33 = scmp.ge.s32.totalorder %s32, 4
      %s34 = scalar_select %p33, 0, %s32
      %s35 = sadd.s32 1, %s26
      %s36 = scalar_select %p33, %s35, %s26
      %p37 = scmp.ge.s32.totalorder %s36, 1
      %s38 = scalar_select %p37, 0, %s36
      %s39 = ssub.s32 %s26, %s38
      %p40 = scmp.eq.s32.totalorder %s39, 0
      %s42 = sadd.s32 %s41, 1
      %s43 = scalar_select %p40, %s41, %s42
      %p46 = pneg %p40
      %p47 = scmp.eq.s32.totalorder %s19, 3
      %p48 = por %p46, %p47
      %p49 = scmp.ne.s32.totalorder %s41, %s44
      %p50 = scmp.eq.s32.totalorder %s19, 0
      %p51 = por %p49, %p50
      %p52 = scmp.ne.s32.totalorder %s41, %s44
      %p53 = scmp.eq.s32.totalorder %s24, 3
      %p54 = por %p52, %p53
      %p55 = scmp.ne.s32.totalorder %s44, %s45
      %p56 = scmp.eq.s32.totalorder %s24, 0
      %p57 = por %p55, %p56
      %p58 = scmp.ne.s32.totalorder %s44, %s45
      %p59 = scmp.eq.s32.totalorder %s25, 3
      %p60 = por %p58, %p59
      %p62 = scmp.ne.s32.totalorder %s45, %s61
      %p63 = scmp.eq.s32.totalorder %s25, 0
      %p64 = por %p62, %p63
      %s65 = ssub.s32 %s27, %s34
      %p66 = scmp.eq.s32.totalorder %s65, 0
      %s68 = sadd.s32 %s67, 1
      %s69 = scalar_select %p66, %s67, %s68
      %p72 = pneg %p66
      %p73 = scmp.eq.s32.totalorder %s19, 3
      %p74 = por %p72, %p73
      %p75 = scmp.ne.s32.totalorder %s67, %s70
      %p76 = scmp.eq.s32.totalorder %s19, 0
      %p77 = por %p75, %p76
      %p78 = scmp.ne.s32.totalorder %s67, %s70
      %p79 = scmp.eq.s32.totalorder %s24, 3
      %p80 = por %p78, %p79
      %p81 = scmp.ne.s32.totalorder %s70, %s71
      %p82 = scmp.eq.s32.totalorder %s24, 0
      %p83 = por %p81, %p82
      %p84 = scmp.ne.s32.totalorder %s70, %s71
      %p85 = scmp.eq.s32.totalorder %s25, 3
      %p86 = por %p84, %p85
      %p88 = scmp.ne.s32.totalorder %s71, %s87
      %p89 = scmp.eq.s32.totalorder %s25, 0
      %p90 = por %p88, %p89
      %s91 = ssub.s32 %s27, %s34
      %p92 = scmp.eq.s32.totalorder %s91, 0
      %s94 = sadd.s32 %s93, 1
      %s95 = scalar_select %p92, %s93, %s94
      %p98 = pneg %p92
      %p99 = scmp.eq.s32.totalorder %s19, 3
      %p100 = por %p98, %p99
      %p101 = scmp.ne.s32.totalorder %s93, %s96
      %p102 = scmp.eq.s32.totalorder %s19, 0
      %p103 = por %p101, %p102
      %p104 = scmp.ne.s32.totalorder %s93, %s96
      %p105 = scmp.eq.s32.totalorder %s24, 3
      %p106 = por %p104, %p105
      %p107 = scmp.ne.s32.totalorder %s96, %s97
      %p108 = scmp.eq.s32.totalorder %s24, 0
      %p109 = por %p107, %p108
      %p110 = scmp.ne.s32.totalorder %s96, %s97
      %p111 = scmp.eq.s32.totalorder %s25, 3
      %p112 = por %p110, %p111
      %p114 = scmp.ne.s32.totalorder %s97, %s113
      %p115 = scmp.eq.s32.totalorder %s25, 0
      %p116 = por %p114, %p115
      %s117 = ssub.s32 %s27, %s34
      %p118 = scmp.eq.s32.totalorder %s117, 0
      %s120 = sadd.s32 %s119, 1
      %s121 = scalar_select %p118, %s119, %s120
      %p124 = pneg %p118
      %p125 = scmp.eq.s32.totalorder %s19, 3
      %p126 = por %p124, %p125
      %p127 = scmp.ne.s32.totalorder %s119, %s122
      %p128 = scmp.eq.s32.totalorder %s19, 0
      %p129 = por %p127, %p128
      %p130 = scmp.ne.s32.totalorder %s119, %s122
      %p131 = scmp.eq.s32.totalorder %s24, 3
      %p132 = por %p130, %p131
      %p133 = scmp.ne.s32.totalorder %s122, %s123
      %p134 = scmp.eq.s32.totalorder %s24, 0
      %p135 = por %p133, %p134
      %p136 = scmp.ne.s32.totalorder %s122, %s123
      %p137 = scmp.eq.s32.totalorder %s25, 3
      %p138 = por %p136, %p137
      %p140 = scmp.ne.s32.totalorder %s123, %s139
      %p141 = scmp.eq.s32.totalorder %s25, 0
      %p142 = por %p140, %p141
      %s144 = sadd.s32 %s143, 1
      %p147 = scmp.eq.s32.totalorder %s19, 3
      %p148 = scmp.ne.s32.totalorder %s143, %s145
      %p149 = scmp.eq.s32.totalorder %s19, 0
      %p150 = por %p148, %p149
      %p151 = scmp.ne.s32.totalorder %s143, %s145
      %p152 = scmp.eq.s32.totalorder %s24, 3
      %p153 = por %p151, %p152
      %p154 = scmp.ne.s32.totalorder %s145, %s146
      %p155 = scmp.eq.s32.totalorder %s24, 0
      %p156 = por %p154, %p155
      %p157 = scmp.ne.s32.totalorder %s145, %s146
      %p158 = scmp.eq.s32.totalorder %s25, 3
      %p159 = por %p157, %p158
      %p161 = scmp.ne.s32.totalorder %s146, %s160
      %p162 = scmp.eq.s32.totalorder %s25, 0
      %p163 = por %p161, %p162
      %s164 = ssub.s32 %s26, %s38
      %p165 = scmp.eq.s32.totalorder %s164, 0
      %s167 = sadd.s32 %s166, 1
      %s168 = scalar_select %p165, %s166, %s167
      %p171 = pneg %p165
      %p172 = scmp.eq.s32.totalorder %s19, 3
      %p173 = por %p171, %p172
      %p174 = scmp.ne.s32.totalorder %s166, %s169
      %p175 = scmp.eq.s32.totalorder %s19, 0
      %p176 = por %p174, %p175
      %p177 = scmp.ne.s32.totalorder %s166, %s169
      %p178 = scmp.eq.s32.totalorder %s24, 3
      %p179 = por %p177, %p178
      %p180 = scmp.ne.s32.totalorder %s169, %s170
      %p181 = scmp.eq.s32.totalorder %s24, 0
      %p182 = por %p180, %p181
      %p183 = scmp.ne.s32.totalorder %s169, %s170
      %p184 = scmp.eq.s32.totalorder %s25, 3
      %p185 = por %p183, %p184
      %p187 = scmp.ne.s32.totalorder %s170, %s186
      %p188 = scmp.eq.s32.totalorder %s25, 0
      %p189 = por %p187, %p188
      %p190 = scmp.le.s32.totalorder 1, %s19
      %p191 = scmp.lt.s32.totalorder %s19, 5
      %p192 = pnand %p190, %p191
      %p193 = pneg %p192
      // Predicated region
      $region9: #{tpu_custom_call.1} parent=5 // pred_check
        _
      $region10: #{tpu_custom_call.1} parent=5 // pred_check_branch
        %195 = sbr.rel (%p192) target = $region12
      $region11: #{tpu_custom_call.1} parent=5 // pred_region
        %s196 = ssub.s32 %s19, 1
        // Predicated region
        $region13: #{tpu_custom_call.1} parent=11 // pred_check
          %p197 = pneg %p57
        $region14: #{tpu_custom_call.1} parent=11 // pred_check_branch
          %199 = sbr.rel (%p197) target = $region16
        $region15: #{tpu_custom_call.1} parent=11 // pred_region
          %s200 = smul.u32 2, %s28
          %202 = vsyncadd [#allocation4], 0
          %s203 = smul.addr %s200, 8
          %s204 = scalar_lea.hbm %s0, %s203
          %s205 = sshll.u32 %s204, 4
          %s206 = int_to_ptr.hbm [resolvable:$true] %s205
          %s207 = sshll.u32 [#allocation3], 4
          %s208 = int_to_ptr.vmem [resolvable:$true] %s207
          %213 = dma.hbm_to_vmem [thread:$0]  %s206, 256, %s208, [#allocation4], 128, 128, 8
        $region16: #{tpu_custom_call.1} parent=11 // pred_fallthru
          _
        // Predicated region
        $region17: #{tpu_custom_call.1} parent=11 // pred_check
          %p214 = pneg %p156
        $region18: #{tpu_custom_call.1} parent=11 // pred_check_branch
          %216 = sbr.rel (%p214) target = $region20
        $region19: #{tpu_custom_call.1} parent=11 // pred_region
          _
        $region20: #{tpu_custom_call.1} parent=11 // pred_fallthru
          _
      $region12: #{tpu_custom_call.1} parent=5 // pred_fallthru
        _
      %p217 = scmp.lt.s32.totalorder %s19, 4
      // Predicated region
      $region21: #{tpu_custom_call.1} parent=5 // pred_check
        %p218 = pneg %p217
      $region22: #{tpu_custom_call.1} parent=5 // pred_check_branch
        %220 = sbr.rel (%p218) target = $region24
      $region23: #{tpu_custom_call.1} parent=5 // pred_region
        // Predicated region
        $region25: #{tpu_custom_call.1} parent=23 // pred_check
          %p221 = pneg %p77
        $region26: #{tpu_custom_call.1} parent=23 // pred_check_branch
          %223 = sbr.rel (%p221) target = $region28
        $region27: #{tpu_custom_call.1} parent=23 // pred_region
          %s224 = sand.u32 %s19, 1
          %s225 = scalar_lea.sflag [#allocation7], %s224
          %s226 = sand.u32 %s67, 1
          %s227 = smul.addr %s226, 16
          %s228 = scalar_lea.vmem [#allocation6], %s227
          %230 = vsyncadd %s225, 0
          %s231 = smul.addr %s27, 4
          %s232 = smul.addr %s231, 4
          %s233 = scalar_lea.hbm %s1, %s232
          %s234 = sshll.u32 %s233, 4
          %s235 = int_to_ptr.hbm [resolvable:$true] %s234
          %s236 = sshll.u32 %s228, 4
          %s237 = int_to_ptr.vmem [resolvable:$true] %s236
          %242 = dma.hbm_to_vmem [thread:$0]  %s235, 256, %s237, %s225, 64, 64, 4
        $region28: #{tpu_custom_call.1} parent=23 // pred_fallthru
          _
        // Predicated region
        $region29: #{tpu_custom_call.1} parent=23 // pred_check
          %p243 = pneg %p103
        $region30: #{tpu_custom_call.1} parent=23 // pred_check_branch
          %245 = sbr.rel (%p243) target = $region32
        $region31: #{tpu_custom_call.1} parent=23 // pred_region
          %s246 = sand.u32 %s19, 1
          %s247 = scalar_lea.sflag [#allocation7], %s246
          %s248 = sand.u32 %s93, 1
          %s249 = scalar_lea.vmem [#allocation8], %s248
          %251 = vsyncadd %s247, 0
          %s252 = scalar_lea.hbm %s2, %s27
          %s254 = sshll.u32 %s252, 4
          %s255 = int_to_ptr.hbm [resolvable:$true] %s254
          %s256 = sshll.u32 %s249, 4
          %s257 = int_to_ptr.vmem [resolvable:$true] %s256
          %259 = dma.hbm_to_vmem [thread:$0]  %s255, 16, %s257, %s247
        $region32: #{tpu_custom_call.1} parent=23 // pred_fallthru
          _
        // Predicated region
        $region33: #{tpu_custom_call.1} parent=23 // pred_check
          %p260 = pneg %p129
        $region34: #{tpu_custom_call.1} parent=23 // pred_check_branch
          %262 = sbr.rel (%p260) target = $region36
        $region35: #{tpu_custom_call.1} parent=23 // pred_region
          %s263 = sand.u32 %s119, 1
          %s264 = scalar_lea.sflag [#allocation10], %s263
          %s265 = sand.u32 %s119, 1
          %s266 = smul.addr %s265, 16
          %s267 = scalar_lea.vmem [#allocation9], %s266
          %269 = vsyncadd %s264, 0
          %s270 = smul.addr %s27, 4
          %s271 = smul.addr %s270, 4
          %s272 = scalar_lea.hbm %s3, %s271
          %s273 = sshll.u32 %s272, 4
          %s274 = int_to_ptr.hbm [resolvable:$true] %s273
          %s275 = sshll.u32 %s267, 4
          %s276 = int_to_ptr.vmem [resolvable:$true] %s275
          %281 = dma.hbm_to_vmem [thread:$0]  %s274, 256, %s276, %s264, 64, 64, 4
        $region36: #{tpu_custom_call.1} parent=23 // pred_fallthru
          _
      $region24: #{tpu_custom_call.1} parent=5 // pred_fallthru
        _
      %p282 = scmp.le.s32.totalorder 1, %s19
      %p283 = scmp.lt.s32.totalorder %s19, 5
      %p284 = pnand %p282, %p283
      %p285 = pneg %p284
      // Predicated region
      $region37: #{tpu_custom_call.1} parent=5 // pred_check
        _
      $region38: #{tpu_custom_call.1} parent=5 // pred_check_branch
        %287 = sbr.rel (%p284) target = $region40
      $region39: #{tpu_custom_call.1} parent=5 // pred_region
        %s288 = ssub.s32 %s19, 1
        // Predicated region
        $region41: #{tpu_custom_call.1} parent=39 // pred_check
          %p289 = pneg %p57
        $region42: #{tpu_custom_call.1} parent=39 // pred_check_branch
          %291 = sbr.rel (%p289) target = $region44
        $region43: #{tpu_custom_call.1} parent=39 // pred_region
          %293 = dma.done [#allocation4], 256
        $region44: #{tpu_custom_call.1} parent=39 // pred_fallthru
          _
        %s294 = sand.u32 %s24, 1
        %s295 = scalar_lea.sflag [#allocation7], %s294
        %s296 = sand.u32 %s70, 1
        %s297 = smul.addr %s296, 16
        %s298 = scalar_lea.vmem [#allocation6], %s297
        // Predicated region
        $region45: #{tpu_custom_call.1} parent=39 // pred_check
          %p299 = pneg %p83
        $region46: #{tpu_custom_call.1} parent=39 // pred_check_branch
          %301 = sbr.rel (%p299) target = $region48
        $region47: #{tpu_custom_call.1} parent=39 // pred_region
          %303 = dma.done %s295, 256
        $region48: #{tpu_custom_call.1} parent=39 // pred_fallthru
          _
        %s304 = sand.u32 %s24, 1
        %s305 = scalar_lea.sflag [#allocation7], %s304
        %s306 = sand.u32 %s96, 1
        %s307 = scalar_lea.vmem [#allocation8], %s306
        // Predicated region
        $region49: #{tpu_custom_call.1} parent=39 // pred_check
          %p308 = pneg %p109
        $region50: #{tpu_custom_call.1} parent=39 // pred_check_branch
          %310 = sbr.rel (%p308) target = $region52
        $region51: #{tpu_custom_call.1} parent=39 // pred_region
          %312 = dma.done %s305, 16
        $region52: #{tpu_custom_call.1} parent=39 // pred_fallthru
          _
        %s313 = sand.u32 %s122, 1
        %s314 = scalar_lea.sflag [#allocation10], %s313
        %s315 = sand.u32 %s122, 1
        %s316 = smul.addr %s315, 16
        %s317 = scalar_lea.vmem [#allocation9], %s316
        // Predicated region
        $region53: #{tpu_custom_call.1} parent=39 // pred_check
          %p318 = pneg %p135
        $region54: #{tpu_custom_call.1} parent=39 // pred_check_branch
          %320 = sbr.rel (%p318) target = $region56
        $region55: #{tpu_custom_call.1} parent=39 // pred_region
          %322 = dma.done %s314, 256
        $region56: #{tpu_custom_call.1} parent=39 // pred_fallthru
          _
        %p323 = pneg %p57
        %p324 = pneg %p54
        %s325 = sand.u32 %s24, 1
        %s326 = scalar_lea.sflag [#allocation7], %s325
        %s327 = sand.u32 %s70, 1
        %s328 = smul.addr %s327, 16
        %s329 = scalar_lea.vmem [#allocation6], %s328
        %p330 = pneg %p83
        %p331 = pneg %p80
        %s332 = sand.u32 %s24, 1
        %s333 = scalar_lea.sflag [#allocation7], %s332
        %s334 = sand.u32 %s96, 1
        %s335 = scalar_lea.vmem [#allocation8], %s334
        %p336 = pneg %p109
        %p337 = pneg %p106
        %s338 = sand.u32 %s122, 1
        %s339 = scalar_lea.sflag [#allocation10], %s338
        %s340 = sand.u32 %s122, 1
        %s341 = smul.addr %s340, 16
        %s342 = scalar_lea.vmem [#allocation9], %s341
        %p343 = pneg %p135
        %p344 = pneg %p132
        %p345 = pneg %p156
        %p346 = pneg %p153
        %p347 = pneg %p182
        %p348 = pneg %p179
        %s349 = smul.u32 2, %s28
        %s350 = smul.u32 2, %s28
        %v352 = vld [vmem:[%s298] sm:$0xf]
        %v353 = vld [vmem:[%s298 + $0x4] sm:$0xf]
        %v354 = vld [vmem:[%s298 + $0x8] sm:$0xf]
        %v355 = vld [vmem:[%s298 + $0xc] sm:$0xf]
        %v356 = vld [vmem:[%s307] sm:$0x1]
        %v357 = vld [vmem:[%s317] sm:$0xf]
        %v358 = vld [vmem:[%s317 + $0x4] sm:$0xf]
        %v359 = vld [vmem:[%s317 + $0x8] sm:$0xf]
        %v360 = vld [vmem:[%s317 + $0xc] sm:$0xf]
        %p361 = scmp.eq.s32.totalorder %s29, 0
        // Predicated region
        $region57: #{tpu_custom_call.1} parent=39 // pred_check
          %p362 = pneg %p361
        $region58: #{tpu_custom_call.1} parent=39 // pred_check_branch
          %364 = sbr.rel (%p362) target = $region60
        $region59: #{tpu_custom_call.1} parent=39 // pred_region
          %v365 = vld [vmem:[%s4] sm:$0x1]
          %v367 = vperm.slane %v365, 0
          %vm369 = vcmask 261120
          %370 = vst.msk [vmem:[#allocation2] sm:$0xff] %vm369, %v367
          %371 = vst.msk [vmem:[#allocation2 + $0x8] sm:$0xff] %vm369, %v367
        $region60: #{tpu_custom_call.1} parent=39 // pred_fallthru
          _
        %v372 = vld [vmem:[#allocation3] sm:$0xff]
        %v373 = vpack.c.bf16 %v372, %v372
        %v375 = vperm.slane %v356, 0
        %v381 = vunpack.c.l.b16 %v352
        %v382 = vunpack.c.l.b16 %v353
        %v383 = vunpack.c.l.b16 %v354
        %v384 = vunpack.c.l.b16 %v355
        %v385 = vpack.c.b16 %v382, %v381
        %v386 = vpack.c.b16 %v384, %v383
        %vm389 = vcmask 261120
        %v391 = vsel %vm389, %v373, 0
        %393 = vmatpush.bf16.msra.mxu0 0
        %394 = vmatpush.bf16.msra.mxu0 0
        %395 = vmatpush.bf16.msra.mxu0 0
        %396 = vmatpush.bf16.msra.mxu0 0
        %397 = vmatpush.bf16.msra.mxu0 0
        %398 = vmatpush.bf16.msra.mxu0 0
        %399 = vmatpush.bf16.msra.mxu0 %v386
        %400 = vmatpush.bf16.msra.mxu0 %v385
        %401 = vmatmul.bf16.gmra.mxu0 %v391
        %v402 = vpop.f32.mrf.mxu0
        %v403 = vadd.f32 %v375, %v402
        %v404 = vpop.f32.mrf.mxu0
        %405 = vdwg.mxu0
        %v406 = vpack.c.bf16 %v403, %v403
        %408 = vrot.lane.b32.xlu0 %v406, 96
        %v409 = vpop.permute.xlu0 %408
        %v411 = vsel %vm389, %v406, 0
        %v414 = vsel %vm389, %v409, 0
        %416 = vmatpush.bf16.xpose.msra.mxu0 0
        %417 = vmatpush.bf16.xpose.msra.mxu0 0
        %418 = vmatpush.bf16.xpose.msra.mxu0 0
        %419 = vmatpush.bf16.xpose.msra.mxu0 0
        %420 = vmatpush.bf16.xpose.msra.mxu0 0
        %421 = vmatpush.bf16.xpose.msra.mxu0 0
        %422 = vmatpush.bf16.xpose.msra.mxu0 0
        %423 = vmatpush.bf16.xpose.msra.mxu0 %v414
        %424 = vmatmul.bf16.gmra.mxu0 %v411
        %v425 = vpop.f32.mrf.mxu0
        %v426 = vadd.f32 0.0, %v425
        %v427 = vpop.f32.mrf.mxu0
        %428 = vdwg.mxu0
        %vm429 = vcmask 64512
        %v430 = vsel %vm429, %v426, -inf
        %431 = vmax.xlane.f32.xlu0 %v430
        %v432 = vpop.xlane.xlu0 %431
        %v433 = vsub.f32 %v426, %v432
        %v434 = vmul.f32 %v433, 1.442695
        %v435 = vpow.pop %v434
        %v436 = vsel %vm429, %v435, 0.0
        %437 = vadd.xlane.f32.xlu0 %v436
        %v438 = vpop.xlane.xlu0 %437
        %v439 = vrcp.pop %v438
        %v440 = vmul.f32 %v435, %v439
        %v441 = vpack.c.bf16 %v440, %v440
        %442 = vrot.lane.b32.xlu0 %v406, 64
        %v443 = vpop.permute.xlu0 %442
        %v445 = vsel %vm429, %v441, 0
        %vm447 = vcmask 1043456
        %v449 = vsel %vm447, %v443, 0
        %451 = vmatpush.bf16.msra.mxu0 0
        %452 = vmatpush.bf16.msra.mxu0 0
        %453 = vmatpush.bf16.msra.mxu0 0
        %454 = vmatpush.bf16.msra.mxu0 0
        %455 = vmatpush.bf16.msra.mxu0 0
        %456 = vmatpush.bf16.msra.mxu0 0
        %457 = vmatpush.bf16.msra.mxu0 0
        %458 = vmatpush.bf16.msra.mxu0 %v449
        %459 = vmatmul.bf16.gmra.mxu0 %v445
        %v460 = vpop.f32.mrf.mxu0
        %v461 = vadd.f32 0.0, %v460
        %v462 = vpop.f32.mrf.mxu0
        %463 = vdwg.mxu0
        %v464 = vpack.c.bf16 %v461, %v461
        %v469 = vunpack.c.l.b16 %v357
        %v470 = vunpack.c.l.b16 %v358
        %v471 = vunpack.c.l.b16 %v359
        %v472 = vunpack.c.l.b16 %v360
        %v473 = vpack.c.b16 %v470, %v469
        %v474 = vpack.c.b16 %v472, %v471
        %v478 = vsel %vm389, %v464, 0
        %480 = vmatpush.bf16.msra.mxu0 0
        %481 = vmatpush.bf16.msra.mxu0 0
        %482 = vmatpush.bf16.msra.mxu0 0
        %483 = vmatpush.bf16.msra.mxu0 0
        %484 = vmatpush.bf16.msra.mxu0 0
        %485 = vmatpush.bf16.msra.mxu0 0
        %486 = vmatpush.bf16.msra.mxu0 %v474
        %487 = vmatpush.bf16.msra.mxu0 %v473
        %488 = vmatmul.bf16.gmra.mxu0 %v478
        %v489 = vpop.f32.mrf.mxu0
        %v490 = vadd.f32 0.0, %v489
        %v491 = vpop.f32.mrf.mxu0
        %492 = vdwg.mxu0
        %v493 = vld [vmem:[#allocation2] sm:$0xff]
        %v494 = vadd.f32 %v493, %v490
        %495 = vst.msk [vmem:[#allocation2] sm:$0xff] %vm389, %v494
        %s496 = scalar_lea.vmem [#allocation3], 8
        %v497 = vld [vmem:[%s496] sm:$0xff]
        %v498 = vpack.c.bf16 %v497, %v497
        %v500 = vsel %vm389, %v498, 0
        %502 = vmatpush.bf16.msra.mxu0 0
        %503 = vmatpush.bf16.msra.mxu0 0
        %504 = vmatpush.bf16.msra.mxu0 0
        %505 = vmatpush.bf16.msra.mxu0 0
        %506 = vmatpush.bf16.msra.mxu0 0
        %507 = vmatpush.bf16.msra.mxu0 0
        %508 = vmatpush.bf16.msra.mxu0 %v386
        %509 = vmatpush.bf16.msra.mxu0 %v385
        %510 = vmatmul.bf16.gmra.mxu0 %v500
        %v511 = vpop.f32.mrf.mxu0
        %v512 = vadd.f32 %v375, %v511
        %v513 = vpop.f32.mrf.mxu0
        %514 = vdwg.mxu0
        %v515 = vpack.c.bf16 %v512, %v512
        %517 = vrot.lane.b32.xlu0 %v515, 96
        %v518 = vpop.permute.xlu0 %517
        %v520 = vsel %vm389, %v515, 0
        %v523 = vsel %vm389, %v518, 0
        %525 = vmatpush.bf16.xpose.msra.mxu0 0
        %526 = vmatpush.bf16.xpose.msra.mxu0 0
        %527 = vmatpush.bf16.xpose.msra.mxu0 0
        %528 = vmatpush.bf16.xpose.msra.mxu0 0
        %529 = vmatpush.bf16.xpose.msra.mxu0 0
        %530 = vmatpush.bf16.xpose.msra.mxu0 0
        %531 = vmatpush.bf16.xpose.msra.mxu0 0
        %532 = vmatpush.bf16.xpose.msra.mxu0 %v523
        %533 = vmatmul.bf16.gmra.mxu0 %v520
        %v534 = vpop.f32.mrf.mxu0
        %v535 = vadd.f32 0.0, %v534
        %v536 = vpop.f32.mrf.mxu0
        %537 = vdwg.mxu0
        %v538 = vsel %vm429, %v535, -inf
        %539 = vmax.xlane.f32.xlu0 %v538
        %v540 = vpop.xlane.xlu0 %539
        %v541 = vsub.f32 %v535, %v540
        %v542 = vmul.f32 %v541, 1.442695
        %v543 = vpow.pop %v542
        %v544 = vsel %vm429, %v543, 0.0
        %545 = vadd.xlane.f32.xlu0 %v544
        %v546 = vpop.xlane.xlu0 %545
        %v547 = vrcp.pop %v546
        %v548 = vmul.f32 %v543, %v547
        %v549 = vpack.c.bf16 %v548, %v548
        %550 = vrot.lane.b32.xlu0 %v515, 64
        %v551 = vpop.permute.xlu0 %550
        %v553 = vsel %vm429, %v549, 0
        %v556 = vsel %vm447, %v551, 0
        %558 = vmatpush.bf16.msra.mxu0 0
        %559 = vmatpush.bf16.msra.mxu0 0
        %560 = vmatpush.bf16.msra.mxu0 0
        %561 = vmatpush.bf16.msra.mxu0 0
        %562 = vmatpush.bf16.msra.mxu0 0
        %563 = vmatpush.bf16.msra.mxu0 0
        %564 = vmatpush.bf16.msra.mxu0 0
        %565 = vmatpush.bf16.msra.mxu0 %v556
        %566 = vmatmul.bf16.gmra.mxu0 %v553
        %v567 = vpop.f32.mrf.mxu0
        %v568 = vadd.f32 0.0, %v567
        %v569 = vpop.f32.mrf.mxu0
        %570 = vdwg.mxu0
        %v571 = vpack.c.bf16 %v568, %v568
        %v573 = vsel %vm389, %v571, 0
        %575 = vmatpush.bf16.msra.mxu0 0
        %576 = vmatpush.bf16.msra.mxu0 0
        %577 = vmatpush.bf16.msra.mxu0 0
        %578 = vmatpush.bf16.msra.mxu0 0
        %579 = vmatpush.bf16.msra.mxu0 0
        %580 = vmatpush.bf16.msra.mxu0 0
        %581 = vmatpush.bf16.msra.mxu0 %v474
        %582 = vmatpush.bf16.msra.mxu0 %v473
        %583 = vmatmul.bf16.gmra.mxu0 %v573
        %v584 = vpop.f32.mrf.mxu0
        %v585 = vadd.f32 0.0, %v584
        %v586 = vpop.f32.mrf.mxu0
        %587 = vdwg.mxu0
        %s588 = scalar_lea.vmem [#allocation2], 8
        %v589 = vld [vmem:[%s588] sm:$0xff]
        %v590 = vadd.f32 %v589, %v585
        %591 = vst.msk [vmem:[%s588] sm:$0xff] %vm389, %v590
        %p592 = scmp.eq.s32.totalorder %s29, 3
        // Predicated region
        $region61: #{tpu_custom_call.1} parent=39 // pred_check
          %p593 = pneg %p592
        $region62: #{tpu_custom_call.1} parent=39 // pred_check_branch
          %595 = sbr.rel (%p593) target = $region64
        $region63: #{tpu_custom_call.1} parent=39 // pred_region
          %v596 = vld [vmem:[#allocation2] sm:$0xff]
          %v597 = vld [vmem:[#allocation2 + $0x8] sm:$0xff]
          %598 = vst.msk [vmem:[#allocation11] sm:$0xff] %vm389, %v596
          %599 = vst.msk [vmem:[#allocation11 + $0x8] sm:$0xff] %vm389, %v597
        $region64: #{tpu_custom_call.1} parent=39 // pred_fallthru
          _
        // Predicated region
        $region65: #{tpu_custom_call.1} parent=39 // pred_check
          %p600 = pneg %p179
        $region66: #{tpu_custom_call.1} parent=39 // pred_check_branch
          %602 = sbr.rel (%p600) target = $region68
        $region67: #{tpu_custom_call.1} parent=39 // pred_region
          %s603 = smul.u32 2, %s28
          %605 = vsyncadd [#allocation5], 0
          %s606 = smul.addr %s603, 8
          %s607 = scalar_lea.hbm %s5, %s606
          %s608 = sshll.u32 [#allocation11], 4
          %s609 = int_to_ptr.vmem [resolvable:$true] %s608
          %s610 = sshll.u32 %s607, 4
          %s611 = int_to_ptr.hbm [resolvable:$true] %s610
          %616 = dma.vmem_to_hbm [thread:$0]  %s609, 256, %s611, [#allocation5], 128, 128, 8
        $region68: #{tpu_custom_call.1} parent=39 // pred_fallthru
          _
        // Predicated region
        $region69: #{tpu_custom_call.1} parent=39 // pred_check
          %p617 = pneg %p179
        $region70: #{tpu_custom_call.1} parent=39 // pred_check_branch
          %619 = sbr.rel (%p617) target = $region72
        $region71: #{tpu_custom_call.1} parent=39 // pred_region
          %621 = dma.done [#allocation5], 256
        $region72: #{tpu_custom_call.1} parent=39 // pred_fallthru
          _
      $region40: #{tpu_custom_call.1} parent=5 // pred_fallthru
        _
      %p622 = scmp.le.s32.totalorder 2, %s19
      // Predicated region
      $region73: #{tpu_custom_call.1} parent=5 // pred_check
        %p623 = pneg %p622
      $region74: #{tpu_custom_call.1} parent=5 // pred_check_branch
        %625 = sbr.rel (%p623) target = $region76
      $region75: #{tpu_custom_call.1} parent=5 // pred_region
        %s626 = ssub.s32 %s19, 2
      $region76: #{tpu_custom_call.1} parent=5 // pred_fallthru
        _
    $region6: #{tpu_custom_call.1} parent=1 // loop_footer
      %s23 = sadd.s32 1, %s19
    $region7: #{tpu_custom_call.1} parent=1 // loop_footer_branch
      %18 = sbr.rel target = $region3
    $region8: #{tpu_custom_call.1} parent=1 // loop_exit
      _
    %627 = vsyncpa [#allocation4], 1
    %s628 = scalar_lea.sflag [#allocation4], 1
    %629 = vsyncpa %s628, 1
    %630 = vsyncpa [#allocation7], 1
    %s631 = scalar_lea.sflag [#allocation7], 1
    %632 = vsyncpa %s631, 1
    %633 = vsyncpa [#allocation10], 1
    %s634 = scalar_lea.sflag [#allocation10], 1
    %635 = vsyncpa %s634, 1
    %636 = vsyncpa [#allocation5], 1
    %s637 = scalar_lea.sflag [#allocation5], 1
    %638 = vsyncpa %s637, 1

</llo_original>
